<compile_context>
chip_gen: v5e
topology: v5e:2x2
jax: 0.10.0
libtpu: 0.0.40
codegen_flags: <defaults>
</compile_context>

<pallas_src>
import functools

import jax
import jax.numpy as jnp
from jax.experimental import pallas as pl
from jax.experimental.pallas import tpu as pltpu


def _attn_probe_kernel(x_ref, w_ref, b_ref, p_ref, o_ref, v_scratch, *,
                       num_heads, head_dim, heads_per_store, compute_dtype):
    # x_ref:     (1, S, H)        compute_dtype  hidden states for batch b
    # w_ref:     (H, H)           compute_dtype  value-projection weight (x @ w)
    # b_ref:     (1, H)           f32            value-projection bias
    # p_ref:     (1, nH, Tq, S)   native dtype   attention probs (query tile)
    # o_ref:     (1, Tq, H)       out dtype      lane-dense output (head-major)
    # v_scratch: (nH, S, Dh)      compute_dtype  projected value, persists
    #                                            across q tiles of one batch
    q_step = pl.program_id(1)

    # ---- value projection: once per batch, full MXU width (N = H) ----------
    @pl.when(q_step == 0)
    def _project():
        v_full = jnp.dot(x_ref[0], w_ref[...],
                         preferred_element_type=jnp.float32)          # [S, H]
        # Single full-lane cast; per-head split is static slices, once/batch.
        v_full = (v_full + b_ref[...]).astype(v_scratch.dtype)
        for h in range(num_heads):                                    # static
            v_scratch[h] = v_full[:, h * head_dim:(h + 1) * head_dim]

    # ---- per-head probs @ value, stored in >=128-lane chunks ---------------
    # probs tiles are cast to the compute dtype only after landing in VMEM;
    # accumulation stays f32 via preferred_element_type.
    for h0 in range(0, num_heads, heads_per_store):                   # static
        h1 = min(h0 + heads_per_store, num_heads)
        outs = []
        for h in range(h0, h1):
            p_h = p_ref[0, h].astype(compute_dtype)                   # [Tq, S]
            outs.append(jnp.dot(p_h, v_scratch[h],
                                preferred_element_type=jnp.float32))  # [Tq,Dh]
        chunk = outs[0] if len(outs) == 1 else jnp.concatenate(outs, axis=-1)
        o_ref[0, :, h0 * head_dim:h1 * head_dim] = chunk.astype(o_ref.dtype)


def attention_probe_hook(hidden_states, attention_probs, w_value, b_value,
                         num_heads, *, compute_dtype=jnp.bfloat16,
                         out_dtype=jnp.bfloat16):
    """Pallas implementation of AttentionProbe._hook_fn's compute.

    Args:
      hidden_states:   [B, S, H]
      attention_probs: [B, nH, S, S]  (read in its native dtype; cast to
                       `compute_dtype` inside the kernel)
      w_value:         [H, H]   (x @ w_value + b_value == Linear_v(x))
      b_value:         [H]
      num_heads:       nH
      compute_dtype:   MXU dtype for probs/value (bf16 default; float32 for a
                       full-precision probe)
      out_dtype:       dtype of the returned attention_values
    Returns:
      dict with 'attention_probs' [B, nH, S, S] and
                'attention_values' [B, nH, S, Dh]
    """
    B, S, H = hidden_states.shape
    Bp, nH, Sq, Sk = attention_probs.shape
    assert (Bp, nH, Sq, Sk) == (B, num_heads, S, S)
    assert H % num_heads == 0
    Dh = H // num_heads

    probs_bytes = jnp.dtype(attention_probs.dtype).itemsize
    out_bytes = jnp.dtype(out_dtype).itemsize
    cbytes = jnp.dtype(compute_dtype).itemsize

    # x / w / bias are tiny next to the probs stream: cast them once at the
    # boundary so their DMAs + the projection matmul run at the compute dtype.
    x_in = hidden_states.astype(compute_dtype)
    w_in = w_value.astype(compute_dtype)
    bias2d = b_value.reshape(1, H).astype(jnp.float32)

    # ---- per-generation VMEM budget (single-counted) ------------------------
    try:
        vmem_capacity = int(pltpu.get_tpu_info().vmem_capacity_bytes)
    except Exception:
        vmem_capacity = 64 * 1024 * 1024            # conservative: v7x per-TC
    budget = (vmem_capacity * 3) // 4               # ~48 MiB v7x, ~96 MiB v5e/v6e

    # q-independent bytes (pipelined blocks counted with their 2 buffers once).
    fixed = (2 * S * H * cbytes                       # hidden-states block
             + 2 * (H * H * cbytes + H * 4)           # weight + bias blocks
             + num_heads * S * Dh * cbytes)           # value scratch (1 buffer)
    # bytes per q-tile row (probs + output blocks, both double-buffered).
    per_row = 2 * num_heads * S * probs_bytes + 2 * H * out_bytes
    headroom = 4 * 1024 * 1024

    # Largest q tile fitting the budget; cap the probs block per buffer at
    # ~16 MiB (diminishing returns beyond that on the ~0.35us/step overhead).
    q_by_budget = max(8, (budget - fixed - headroom) // per_row)
    q_by_block = max(8, (16 * 1024 * 1024) // (num_heads * S * probs_bytes))
    q_tile = min(int(q_by_budget), int(q_by_block))
    if q_tile >= S:
        q_tile = S
    else:
        q_tile = max(128, (q_tile // 128) * 128)
        q_tile = min(q_tile, S)
    num_q = pl.cdiv(S, q_tile)

    need = fixed + q_tile * per_row
    vmem_limit = int(min(budget, max(int(need * 1.25) + headroom,
                                     32 * 1024 * 1024)))

    # Group heads so each output store spans >=128 lanes (head pairs at Dh=64).
    heads_per_store = max(1, min(num_heads, 128 // Dh)) if Dh < 128 else 1

    kernel = functools.partial(
        _attn_probe_kernel, num_heads=num_heads, head_dim=Dh,
        heads_per_store=heads_per_store, compute_dtype=compute_dtype)

    out_flat = pl.pallas_call(
        kernel,
        out_shape=jax.ShapeDtypeStruct((B, S, H), out_dtype),
        grid_spec=pltpu.PrefetchScalarGridSpec(
            num_scalar_prefetch=0,
            grid=(B, num_q),
            in_specs=[
                # hidden states: same block across q -> DMA'd once per batch
                pl.BlockSpec((1, S, H), lambda b, q: (b, 0, 0)),
                # full projection weight / bias: constant block -> DMA'd once
                pl.BlockSpec((H, H), lambda b, q: (0, 0)),
                pl.BlockSpec((1, H), lambda b, q: (0, 0)),
                # probs in native dtype, tiled along the query dimension
                pl.BlockSpec((1, num_heads, q_tile, S),
                             lambda b, q: (b, 0, q, 0)),
            ],
            # lane-dense output (last dim = H); head transpose done outside
            out_specs=pl.BlockSpec((1, q_tile, H), lambda b, q: (b, q, 0)),
            scratch_shapes=[pltpu.VMEM((num_heads, S, Dh), compute_dtype)],
        ),
        compiler_params=pltpu.CompilerParams(
            # q must stay 'arbitrary': v_scratch written at q==0 is reused by
            # later q tiles of the same batch. B stays 'parallel' so megacore
            # shards over whole batches (each core recomputes its own scratch).
            dimension_semantics=("parallel", "arbitrary"),
            vmem_limit_bytes=vmem_limit,
        ),
    )(x_in, w_in, bias2d, attention_probs)

    # Head-major columns -> [B, nH, S, Dh], matching torch's
    # .view(B, S, nH, Dh).transpose(1, 2).  (Foldable into a consumer that
    # accepts the lane-dense [B, S, H] layout directly.)
    attention_values = out_flat.reshape(B, S, num_heads, Dh).transpose(
        0, 2, 1, 3)
    return {"attention_probs": attention_probs,
            "attention_values": attention_values}


def _reference(hidden_states, attention_probs, w_value, b_value, num_heads):
    B, S, H = hidden_states.shape
    Dh = H // num_heads
    value = hidden_states @ w_value + b_value                          # [B,S,H]
    value = value.reshape(B, S, num_heads, Dh).transpose(0, 2, 1, 3)   # [B,nH,S,Dh]
    return jnp.einsum("bhqk,bhkd->bhqd", attention_probs, value)


if __name__ == "__main__":
    # Small shapes consistent with the module: one "layer" worth of hook data.
    B, S, H, num_heads = 2, 8, 32, 4          # head_size = 8
    key = jax.random.PRNGKey(0)
    k1, k2, k3, k4 = jax.random.split(key, 4)

    hidden_states = jax.random.normal(k1, (B, S, H), dtype=jnp.float32)

    # attention_probs: softmax-normalized rows, as BERT would produce.
    logits = jax.random.normal(k2, (B, num_heads, S, S), dtype=jnp.float32)
    attention_probs = jax.nn.softmax(logits, axis=-1)

    # Deterministic synthetic value-projection parameters (no checkpoint load).
    w_value = 0.02 * jax.random.normal(k3, (H, H), dtype=jnp.float32)
    b_value = 0.01 * jax.random.normal(k4, (H,), dtype=jnp.float32)

    result = attention_probe_hook(hidden_states, attention_probs,
                                  w_value, b_value, num_heads)
    jax.block_until_ready(result["attention_values"])

    ref = _reference(hidden_states, attention_probs, w_value, b_value,
                     num_heads)
    assert result["attention_values"].shape == (B, num_heads, S, H // num_heads)
    # bf16 compute / bf16 output with f32 accumulation -> relaxed tolerance.
    assert jnp.allclose(result["attention_values"].astype(jnp.float32), ref,
                        atol=2e-2, rtol=2e-2)

    # TODO(synk): tokenizer + full BERT encoder forward (and the
    # matplotlib/seaborn cosine-similarity visualization) have no Pallas
    # equivalent; only the hook's value-projection + probs@value compute is
    # kernelized.
    print("KERNEL_OK")
</pallas_src>

<mosaic_0001>
module attributes {stable_mosaic.version = 11 : i64} {
  func.func @_attn_probe_kernel(%arg0: i32, %arg1: i32, %arg2: memref<1x8x32xbf16, #tpu.memory_space<vmem>>, %arg3: memref<32x32xbf16, #tpu.memory_space<vmem>>, %arg4: memref<1x32xf32, #tpu.memory_space<vmem>>, %arg5: memref<1x4x8x8xf32, #tpu.memory_space<vmem>>, %arg6: memref<1x8x32xbf16, #tpu.memory_space<vmem>>, %arg7: memref<4x8x8xbf16, #tpu.memory_space<vmem>>) attributes {dimension_semantics = [#tpu.dimension_semantics<parallel>, #tpu.dimension_semantics<arbitrary>], iteration_bounds = array<i64: 2, 1>, scalar_prefetch = 0 : i64, scratch_operands = 1 : i64, tpu.core_type = #tpu.core_type<tc>, window_params = [{transform_indices = @transform_0, window_bounds = array<i64: 1, 8, 32>}, {pipeline_mode = #tpu.pipeline_mode<synchronous>, transform_indices = @transform_1, window_bounds = array<i64: 32, 32>}, {pipeline_mode = #tpu.pipeline_mode<synchronous>, transform_indices = @transform_2, window_bounds = array<i64: 1, 32>}, {transform_indices = @transform_3, window_bounds = array<i64: 1, 4, 8, 8>}, {transform_indices = @transform_4, window_bounds = array<i64: 1, 8, 32>}]} {
    %c0_i32 = arith.constant 0 : i32
    %0 = arith.cmpi eq, %arg1, %c0_i32 : i32
    %1 = arith.extui %0 : i1 to i32
    %c0_i32_0 = arith.constant 0 : i32
    %2 = arith.cmpi ne, %1, %c0_i32_0 : i32
    scf.if %2 {
      %c0_31 = arith.constant 0 : index
      %c0_32 = arith.constant 0 : index
      %c0_33 = arith.constant 0 : index
      %32 = vector.load %arg2[%c0_31, %c0_32, %c0_33] : memref<1x8x32xbf16, #tpu.memory_space<vmem>>, vector<1x8x32xbf16>
      %33 = vector.shape_cast %32 : vector<1x8x32xbf16> to vector<8x32xbf16>
      %c0_34 = arith.constant 0 : index
      %c0_35 = arith.constant 0 : index
      %34 = vector.load %arg3[%c0_34, %c0_35] : memref<32x32xbf16, #tpu.memory_space<vmem>>, vector<32x32xbf16>
      %cst_36 = arith.constant dense<0.000000e+00> : vector<8x32xf32>
      %35 = tpu.matmul %33, %34, %cst_36 {dimension_numbers = #tpu.dot_dimension_numbers<[1], [0], [0], [1], [0, 0, 1, 1], [], []>} : vector<8x32xbf16>, vector<32x32xbf16>, vector<8x32xf32> -> vector<8x32xf32>
      %c0_37 = arith.constant 0 : index
      %c0_38 = arith.constant 0 : index
      %36 = vector.load %arg4[%c0_37, %c0_38] : memref<1x32xf32, #tpu.memory_space<vmem>>, vector<1x32xf32>
      %37 = vector.broadcast %36 : vector<1x32xf32> to vector<8x32xf32>
      %38 = arith.addf %35, %37 : vector<8x32xf32>
      %39 = arith.truncf %38 : vector<8x32xf32> to vector<8x32xbf16>
      %40 = vector.extract_strided_slice %39 {offsets = [0, 0], sizes = [8, 8], strides = [1, 1]} : vector<8x32xbf16> to vector<8x8xbf16>
      %c0_39 = arith.constant 0 : index
      %c0_40 = arith.constant 0 : index
      %c0_41 = arith.constant 0 : index
      %41 = vector.load %arg7[%c0_39, %c0_40, %c0_41] : memref<4x8x8xbf16, #tpu.memory_space<vmem>>, vector<1x8x8xbf16>
      %42 = vector.shape_cast %41 : vector<1x8x8xbf16> to vector<8x8xbf16>
      %43 = vector.shape_cast %40 : vector<8x8xbf16> to vector<1x8x8xbf16>
      tpu.vector_store %arg7[%c0_39, %c0_40, %c0_41], %43 {strides = array<i32>} : memref<4x8x8xbf16, #tpu.memory_space<vmem>>, vector<1x8x8xbf16>,
      %44 = vector.extract_strided_slice %39 {offsets = [0, 8], sizes = [8, 8], strides = [1, 1]} : vector<8x32xbf16> to vector<8x8xbf16>
      %c1_42 = arith.constant 1 : index
      %c0_43 = arith.constant 0 : index
      %c0_44 = arith.constant 0 : index
      %45 = vector.load %arg7[%c1_42, %c0_43, %c0_44] : memref<4x8x8xbf16, #tpu.memory_space<vmem>>, vector<1x8x8xbf16>
      %46 = vector.shape_cast %45 : vector<1x8x8xbf16> to vector<8x8xbf16>
      %47 = vector.shape_cast %44 : vector<8x8xbf16> to vector<1x8x8xbf16>
      tpu.vector_store %arg7[%c1_42, %c0_43, %c0_44], %47 {strides = array<i32>} : memref<4x8x8xbf16, #tpu.memory_space<vmem>>, vector<1x8x8xbf16>,
      %48 = vector.extract_strided_slice %39 {offsets = [0, 16], sizes = [8, 8], strides = [1, 1]} : vector<8x32xbf16> to vector<8x8xbf16>
      %c2_45 = arith.constant 2 : index
      %c0_46 = arith.constant 0 : index
      %c0_47 = arith.constant 0 : index
      %49 = vector.load %arg7[%c2_45, %c0_46, %c0_47] : memref<4x8x8xbf16, #tpu.memory_space<vmem>>, vector<1x8x8xbf16>
      %50 = vector.shape_cast %49 : vector<1x8x8xbf16> to vector<8x8xbf16>
      %51 = vector.shape_cast %48 : vector<8x8xbf16> to vector<1x8x8xbf16>
      tpu.vector_store %arg7[%c2_45, %c0_46, %c0_47], %51 {strides = array<i32>} : memref<4x8x8xbf16, #tpu.memory_space<vmem>>, vector<1x8x8xbf16>,
      %52 = vector.extract_strided_slice %39 {offsets = [0, 24], sizes = [8, 8], strides = [1, 1]} : vector<8x32xbf16> to vector<8x8xbf16>
      %c3_48 = arith.constant 3 : index
      %c0_49 = arith.constant 0 : index
      %c0_50 = arith.constant 0 : index
      %53 = vector.load %arg7[%c3_48, %c0_49, %c0_50] : memref<4x8x8xbf16, #tpu.memory_space<vmem>>, vector<1x8x8xbf16>
      %54 = vector.shape_cast %53 : vector<1x8x8xbf16> to vector<8x8xbf16>
      %55 = vector.shape_cast %52 : vector<8x8xbf16> to vector<1x8x8xbf16>
      tpu.vector_store %arg7[%c3_48, %c0_49, %c0_50], %55 {strides = array<i32>} : memref<4x8x8xbf16, #tpu.memory_space<vmem>>, vector<1x8x8xbf16>,
    } else {
    }
    %c0 = arith.constant 0 : index
    %c0_1 = arith.constant 0 : index
    %c0_2 = arith.constant 0 : index
    %c0_3 = arith.constant 0 : index
    %3 = vector.load %arg5[%c0, %c0_1, %c0_2, %c0_3] : memref<1x4x8x8xf32, #tpu.memory_space<vmem>>, vector<1x1x8x8xf32>
    %4 = vector.shape_cast %3 : vector<1x1x8x8xf32> to vector<8x8xf32>
    %5 = arith.truncf %4 : vector<8x8xf32> to vector<8x8xbf16>
    %c0_4 = arith.constant 0 : index
    %c0_5 = arith.constant 0 : index
    %c0_6 = arith.constant 0 : index
    %6 = vector.load %arg7[%c0_4, %c0_5, %c0_6] : memref<4x8x8xbf16, #tpu.memory_space<vmem>>, vector<1x8x8xbf16>
    %7 = vector.shape_cast %6 : vector<1x8x8xbf16> to vector<8x8xbf16>
    %cst = arith.constant dense<0.000000e+00> : vector<8x8xf32>
    %8 = tpu.matmul %5, %7, %cst {dimension_numbers = #tpu.dot_dimension_numbers<[1], [0], [0], [1], [0, 0, 1, 1], [], []>} : vector<8x8xbf16>, vector<8x8xbf16>, vector<8x8xf32> -> vector<8x8xf32>
    %c0_7 = arith.constant 0 : index
    %c1 = arith.constant 1 : index
    %c0_8 = arith.constant 0 : index
    %c0_9 = arith.constant 0 : index
    %9 = vector.load %arg5[%c0_7, %c1, %c0_8, %c0_9] : memref<1x4x8x8xf32, #tpu.memory_space<vmem>>, vector<1x1x8x8xf32>
    %10 = vector.shape_cast %9 : vector<1x1x8x8xf32> to vector<8x8xf32>
    %11 = arith.truncf %10 : vector<8x8xf32> to vector<8x8xbf16>
    %c1_10 = arith.constant 1 : index
    %c0_11 = arith.constant 0 : index
    %c0_12 = arith.constant 0 : index
    %12 = vector.load %arg7[%c1_10, %c0_11, %c0_12] : memref<4x8x8xbf16, #tpu.memory_space<vmem>>, vector<1x8x8xbf16>
    %13 = vector.shape_cast %12 : vector<1x8x8xbf16> to vector<8x8xbf16>
    %cst_13 = arith.constant dense<0.000000e+00> : vector<8x8xf32>
    %14 = tpu.matmul %11, %13, %cst_13 {dimension_numbers = #tpu.dot_dimension_numbers<[1], [0], [0], [1], [0, 0, 1, 1], [], []>} : vector<8x8xbf16>, vector<8x8xbf16>, vector<8x8xf32> -> vector<8x8xf32>
    %c0_14 = arith.constant 0 : index
    %c2 = arith.constant 2 : index
    %c0_15 = arith.constant 0 : index
    %c0_16 = arith.constant 0 : index
    %15 = vector.load %arg5[%c0_14, %c2, %c0_15, %c0_16] : memref<1x4x8x8xf32, #tpu.memory_space<vmem>>, vector<1x1x8x8xf32>
    %16 = vector.shape_cast %15 : vector<1x1x8x8xf32> to vector<8x8xf32>
    %17 = arith.truncf %16 : vector<8x8xf32> to vector<8x8xbf16>
    %c2_17 = arith.constant 2 : index
    %c0_18 = arith.constant 0 : index
    %c0_19 = arith.constant 0 : index
    %18 = vector.load %arg7[%c2_17, %c0_18, %c0_19] : memref<4x8x8xbf16, #tpu.memory_space<vmem>>, vector<1x8x8xbf16>
    %19 = vector.shape_cast %18 : vector<1x8x8xbf16> to vector<8x8xbf16>
    %cst_20 = arith.constant dense<0.000000e+00> : vector<8x8xf32>
    %20 = tpu.matmul %17, %19, %cst_20 {dimension_numbers = #tpu.dot_dimension_numbers<[1], [0], [0], [1], [0, 0, 1, 1], [], []>} : vector<8x8xbf16>, vector<8x8xbf16>, vector<8x8xf32> -> vector<8x8xf32>
    %c0_21 = arith.constant 0 : index
    %c3 = arith.constant 3 : index
    %c0_22 = arith.constant 0 : index
    %c0_23 = arith.constant 0 : index
    %21 = vector.load %arg5[%c0_21, %c3, %c0_22, %c0_23] : memref<1x4x8x8xf32, #tpu.memory_space<vmem>>, vector<1x1x8x8xf32>
    %22 = vector.shape_cast %21 : vector<1x1x8x8xf32> to vector<8x8xf32>
    %23 = arith.truncf %22 : vector<8x8xf32> to vector<8x8xbf16>
    %c3_24 = arith.constant 3 : index
    %c0_25 = arith.constant 0 : index
    %c0_26 = arith.constant 0 : index
    %24 = vector.load %arg7[%c3_24, %c0_25, %c0_26] : memref<4x8x8xbf16, #tpu.memory_space<vmem>>, vector<1x8x8xbf16>
    %25 = vector.shape_cast %24 : vector<1x8x8xbf16> to vector<8x8xbf16>
    %cst_27 = arith.constant dense<0.000000e+00> : vector<8x8xf32>
    %26 = tpu.matmul %23, %25, %cst_27 {dimension_numbers = #tpu.dot_dimension_numbers<[1], [0], [0], [1], [0, 0, 1, 1], [], []>} : vector<8x8xbf16>, vector<8x8xbf16>, vector<8x8xf32> -> vector<8x8xf32>
    %27 = tpu.concatenate %8, %14, %20, %26 in 1 : vector<8x8xf32>, vector<8x8xf32>, vector<8x8xf32>, vector<8x8xf32> -> vector<8x32xf32>
    %28 = arith.truncf %27 : vector<8x32xf32> to vector<8x32xbf16>
    %c0_28 = arith.constant 0 : index
    %c0_29 = arith.constant 0 : index
    %c0_30 = arith.constant 0 : index
    %29 = vector.load %arg6[%c0_28, %c0_29, %c0_30] : memref<1x8x32xbf16, #tpu.memory_space<vmem>>, vector<1x8x32xbf16>
    %30 = vector.shape_cast %29 : vector<1x8x32xbf16> to vector<8x32xbf16>
    %31 = vector.shape_cast %28 : vector<8x32xbf16> to vector<1x8x32xbf16>
    tpu.vector_store %arg6[%c0_28, %c0_29, %c0_30], %31 {strides = array<i32>} : memref<1x8x32xbf16, #tpu.memory_space<vmem>>, vector<1x8x32xbf16>,
    return
  }
  func.func @transform_0(%arg0: i32, %arg1: i32) -> (i32, i32, i32) {
    %c0_i32 = arith.constant 0 : i32
    %c0_i32_0 = arith.constant 0 : i32
    %c0_i32_1 = arith.constant 0 : i32
    return %arg0, %c0_i32, %c0_i32_0 : i32, i32, i32
  }
  func.func @transform_1(%arg0: i32, %arg1: i32) -> (i32, i32) {
    %c0_i32 = arith.constant 0 : i32
    %c0_i32_0 = arith.constant 0 : i32
    %c0_i32_1 = arith.constant 0 : i32
    return %c0_i32, %c0_i32_0 : i32, i32
  }
  func.func @transform_2(%arg0: i32, %arg1: i32) -> (i32, i32) {
    %c0_i32 = arith.constant 0 : i32
    %c0_i32_0 = arith.constant 0 : i32
    %c0_i32_1 = arith.constant 0 : i32
    return %c0_i32, %c0_i32_0 : i32, i32
  }
  func.func @transform_3(%arg0: i32, %arg1: i32) -> (i32, i32, i32, i32) {
    %c0_i32 = arith.constant 0 : i32
    %c0_i32_0 = arith.constant 0 : i32
    %c0_i32_1 = arith.constant 0 : i32
    return %arg0, %c0_i32, %arg1, %c0_i32_0 : i32, i32, i32, i32
  }
  func.func @transform_4(%arg0: i32, %arg1: i32) -> (i32, i32, i32) {
    %c0_i32 = arith.constant 0 : i32
    %c0_i32_0 = arith.constant 0 : i32
    return %arg0, %arg1, %c0_i32 : i32, i32, i32
  }
}

</mosaic_0001>

<llo_original>
// kernel: tpu_custom_call.1
$region0: #{tpu_custom_call.1}
  #allocation0 [shape = 'u32[]', space=smem, size = 0x4, offset = 0x4, fixed_abs, tag = 'smem constant byte address 0x4 - core index']
  #allocation1 [shape = 'u32[72,128]{1,0:T(1,128)}', space=vmem, size = 0x9000, scoped, tag = 'internal scratch']
  #allocation2 [shape = 'bf16[4,8,8]{2,1,0:T(8,128)(2,1)}', space=vmem, size = 0x2000, scoped, tag = 'scratch operand']
  %s0 = inlined_call_operand.hbm [shape: bf16[2,8,32], index: 0, kind: input, shape index: {}]
  %s1 = inlined_call_operand.hbm [shape: bf16[32,32], index: 1, kind: input, shape index: {}]
  %s2 = inlined_call_operand.vmem [shape: f32[1,32], index: 2, kind: input, shape index: {}]
  %s3 = inlined_call_operand.hbm [shape: f32[2,4,8,8], index: 3, kind: input, shape index: {}]
  %s4 = inlined_call_operand.hbm [shape: bf16[2,8,32], index: 4, kind: output, shape index: {}]
  %s5 = sld [smem:[#allocation0]]
  $region65: #{tpu_custom_call.1} parent=0
    _
  %s7 = ssub.s32 1, %s5
  %s8 = scalar_select 0, %s7, %s5
  $region1: #{tpu_custom_call.1} parent=0
    #allocation3 [shape = 'u8[4096]{0}', space=vmem, size = 0x1000, scoped, tag = 'input window, operand 0']
    #allocation4 [shape = 's32[2]{0}', space=sflag, size = 0x8, scoped, tag = 'scoped memory for tpu_custom_call.1']
    #allocation5 [shape = 's32[2]{0}', space=sflag, size = 0x8, scoped, tag = 'scoped memory for tpu_custom_call.1']
    #allocation6 [shape = 'u8[8192]{0}', space=vmem, size = 0x2000, scoped, tag = 'input window, operand 1, single buffered']
    #allocation7 [shape = 's32[1]{0}', space=sflag, size = 0x4, scoped, tag = 'scoped memory for tpu_custom_call.1']
    #allocation8 [shape = 'u8[32768]{0}', space=vmem, size = 0x8000, scoped, tag = 'input window, operand 3']
    #allocation9 [shape = 'u8[4096]{0}', space=vmem, size = 0x1000, scoped, tag = 'output window, operand 0']
    %9 = vsyncpa [#allocation4], 0
    %s10 = scalar_lea.sflag [#allocation4], 1
    %11 = vsyncpa %s10, 0
    %12 = vsyncpa [#allocation7], 0
    %13 = vsyncpa [#allocation5], 0
    %s14 = scalar_lea.sflag [#allocation5], 1
    %15 = vsyncpa %s14, 0
    loop: start=0, step=1, limit=4
    $region2: #{tpu_custom_call.1} parent=1 // loop_pre_header
      _
    $region3: #{tpu_custom_call.1} parent=1 // loop_header
      %s17 = sphi 0, %s21
      %p18 = scmp.ge.s32.totalorder %s17, 4
      %s24 = sphi 0, %s36
      %s25 = sphi 0, %s32
      %s26 = sphi 0, %s24
      %s27 = sphi 0, %s25
      %s28 = sphi 0, %s26
      %s29 = sphi 0, %s27
      %s39 = sphi 0, %s41
      %s42 = sphi 0, %s39
      %s43 = sphi 0, %s42
      %s59 = sphi 0, %s43
      %s63 = sphi 0, %s63
      %s65 = sphi 0, %s63
      %s66 = sphi 0, %s65
      %s80 = sphi 0, %s66
      %s84 = sphi 0, %s84
      %s86 = sphi 0, %s84
      %s87 = sphi 0, %s86
      %s101 = sphi 0, %s87
      %s109 = sphi 0, %s111
      %s112 = sphi 0, %s109
      %s113 = sphi 0, %s112
      %s129 = sphi 0, %s113
      %s137 = sphi 0, %s139
      %s140 = sphi 0, %s137
      %s141 = sphi 0, %s140
      %s157 = sphi 0, %s141
    $region4: #{tpu_custom_call.1} parent=1 // loop_header_branch
      %20 = sbr.rel (%p18) target = $region8
    $region5: #{tpu_custom_call.1} parent=1 // loop_body
      %s22 = ssub.s32 %s17, 1
      %s23 = ssub.s32 %s17, 2
      %s30 = sadd.s32 1, %s25
      %p31 = scmp.ge.s32.totalorder %s30, 1
      %s32 = scalar_select %p31, 0, %s30
      %s33 = sadd.s32 1, %s24
      %s34 = scalar_select %p31, %s33, %s24
      %p35 = scmp.ge.s32.totalorder %s34, 2
      %s36 = scalar_select %p35, 0, %s34
      %s37 = ssub.s32 %s24, %s36
      %p38 = scmp.eq.s32.totalorder %s37, 0
      %s40 = sadd.s32 %s39, 1
      %s41 = scalar_select %p38, %s39, %s40
      %p44 = pneg %p38
      %p45 = scmp.eq.s32.totalorder %s17, 1
      %p46 = por %p44, %p45
      %p47 = scmp.ne.s32.totalorder %s39, %s42
      %p48 = scmp.eq.s32.totalorder %s17, 0
      %p49 = por %p47, %p48
      %p50 = scmp.ne.s32.totalorder %s39, %s42
      %p51 = scmp.eq.s32.totalorder %s22, 1
      %p52 = por %p50, %p51
      %p53 = scmp.ne.s32.totalorder %s42, %s43
      %p54 = scmp.eq.s32.totalorder %s22, 0
      %p55 = por %p53, %p54
      %p56 = scmp.ne.s32.totalorder %s42, %s43
      %p57 = scmp.eq.s32.totalorder %s23, 1
      %p58 = por %p56, %p57
      %p60 = scmp.ne.s32.totalorder %s43, %s59
      %p61 = scmp.eq.s32.totalorder %s23, 0
      %p62 = por %p60, %p61
      %s64 = sadd.s32 %s63, 1
      %p67 = scmp.eq.s32.totalorder %s17, 1
      %p68 = scmp.ne.s32.totalorder %s63, %s65
      %p69 = scmp.eq.s32.totalorder %s17, 0
      %p70 = por %p68, %p69
      %p71 = scmp.ne.s32.totalorder %s63, %s65
      %p72 = scmp.eq.s32.totalorder %s22, 1
      %p73 = por %p71, %p72
      %p74 = scmp.ne.s32.totalorder %s65, %s66
      %p75 = scmp.eq.s32.totalorder %s22, 0
      %p76 = por %p74, %p75
      %p77 = scmp.ne.s32.totalorder %s65, %s66
      %p78 = scmp.eq.s32.totalorder %s23, 1
      %p79 = por %p77, %p78
      %p81 = scmp.ne.s32.totalorder %s66, %s80
      %p82 = scmp.eq.s32.totalorder %s23, 0
      %p83 = por %p81, %p82
      %s85 = sadd.s32 %s84, 1
      %p88 = scmp.eq.s32.totalorder %s17, 1
      %p89 = scmp.ne.s32.totalorder %s84, %s86
      %p90 = scmp.eq.s32.totalorder %s17, 0
      %p91 = por %p89, %p90
      %p92 = scmp.ne.s32.totalorder %s84, %s86
      %p93 = scmp.eq.s32.totalorder %s22, 1
      %p94 = por %p92, %p93
      %p95 = scmp.ne.s32.totalorder %s86, %s87
      %p96 = scmp.eq.s32.totalorder %s22, 0
      %p97 = por %p95, %p96
      %p98 = scmp.ne.s32.totalorder %s86, %s87
      %p99 = scmp.eq.s32.totalorder %s23, 1
      %p100 = por %p98, %p99
      %p102 = scmp.ne.s32.totalorder %s87, %s101
      %p103 = scmp.eq.s32.totalorder %s23, 0
      %p104 = por %p102, %p103
      %s105 = ssub.s32 %s24, %s36
      %s106 = ssub.s32 %s25, %s32
      %s107 = sor.u32 %s105, %s106
      %p108 = scmp.eq.s32.totalorder %s107, 0
      %s110 = sadd.s32 %s109, 1
      %s111 = scalar_select %p108, %s109, %s110
      %p114 = pneg %p108
      %p115 = scmp.eq.s32.totalorder %s17, 1
      %p116 = por %p114, %p115
      %p117 = scmp.ne.s32.totalorder %s109, %s112
      %p118 = scmp.eq.s32.totalorder %s17, 0
      %p119 = por %p117, %p118
      %p120 = scmp.ne.s32.totalorder %s109, %s112
      %p121 = scmp.eq.s32.totalorder %s22, 1
      %p122 = por %p120, %p121
      %p123 = scmp.ne.s32.totalorder %s112, %s113
      %p124 = scmp.eq.s32.totalorder %s22, 0
      %p125 = por %p123, %p124
      %p126 = scmp.ne.s32.totalorder %s112, %s113
      %p127 = scmp.eq.s32.totalorder %s23, 1
      %p128 = por %p126, %p127
      %p130 = scmp.ne.s32.totalorder %s113, %s129
      %p131 = scmp.eq.s32.totalorder %s23, 0
      %p132 = por %p130, %p131
      %s133 = ssub.s32 %s24, %s36
      %s134 = ssub.s32 %s25, %s32
      %s135 = sor.u32 %s133, %s134
      %p136 = scmp.eq.s32.totalorder %s135, 0
      %s138 = sadd.s32 %s137, 1
      %s139 = scalar_select %p136, %s137, %s138
      %p142 = pneg %p136
      %p143 = scmp.eq.s32.totalorder %s17, 1
      %p144 = por %p142, %p143
      %p145 = scmp.ne.s32.totalorder %s137, %s140
      %p146 = scmp.eq.s32.totalorder %s17, 0
      %p147 = por %p145, %p146
      %p148 = scmp.ne.s32.totalorder %s137, %s140
      %p149 = scmp.eq.s32.totalorder %s22, 1
      %p150 = por %p148, %p149
      %p151 = scmp.ne.s32.totalorder %s140, %s141
      %p152 = scmp.eq.s32.totalorder %s22, 0
      %p153 = por %p151, %p152
      %p154 = scmp.ne.s32.totalorder %s140, %s141
      %p155 = scmp.eq.s32.totalorder %s23, 1
      %p156 = por %p154, %p155
      %p158 = scmp.ne.s32.totalorder %s141, %s157
      %p159 = scmp.eq.s32.totalorder %s23, 0
      %p160 = por %p158, %p159
      %p161 = scmp.le.s32.totalorder 1, %s17
      %p162 = scmp.lt.s32.totalorder %s17, 3
      %p163 = pnand %p161, %p162
      %p164 = pneg %p163
      // Predicated region
      $region9: #{tpu_custom_call.1} parent=5 // pred_check
        _
      $region10: #{tpu_custom_call.1} parent=5 // pred_check_branch
        %166 = sbr.rel (%p163) target = $region12
      $region11: #{tpu_custom_call.1} parent=5 // pred_region
        %s167 = ssub.s32 %s17, 1
        // Predicated region
        $region13: #{tpu_custom_call.1} parent=11 // pred_check
          %p168 = pneg %p76
        $region14: #{tpu_custom_call.1} parent=11 // pred_check_branch
          %170 = sbr.rel (%p168) target = $region16
        $region15: #{tpu_custom_call.1} parent=11 // pred_region
          %172 = vsyncadd [#allocation7], 0
          %s173 = sshll.u32 %s1, 4
          %s174 = int_to_ptr.hbm [resolvable:$true] %s173
          %s175 = sshll.u32 [#allocation6], 4
          %s176 = int_to_ptr.vmem [resolvable:$true] %s175
          %181 = dma.hbm_to_vmem [thread:$0]  %s174, 256, %s176, [#allocation7], 64, 64, 4
        $region16: #{tpu_custom_call.1} parent=11 // pred_fallthru
          _
        // Predicated region
        $region17: #{tpu_custom_call.1} parent=11 // pred_check
          %p182 = pneg %p97
        $region18: #{tpu_custom_call.1} parent=11 // pred_check_branch
          %184 = sbr.rel (%p182) target = $region20
        $region19: #{tpu_custom_call.1} parent=11 // pred_region
          _
        $region20: #{tpu_custom_call.1} parent=11 // pred_fallthru
          _
      $region12: #{tpu_custom_call.1} parent=5 // pred_fallthru
        _
      %p185 = scmp.lt.s32.totalorder %s17, 2
      // Predicated region
      $region21: #{tpu_custom_call.1} parent=5 // pred_check
        %p186 = pneg %p185
      $region22: #{tpu_custom_call.1} parent=5 // pred_check_branch
        %188 = sbr.rel (%p186) target = $region24
      $region23: #{tpu_custom_call.1} parent=5 // pred_region
        // Predicated region
        $region25: #{tpu_custom_call.1} parent=23 // pred_check
          %p189 = pneg %p49
        $region26: #{tpu_custom_call.1} parent=23 // pred_check_branch
          %191 = sbr.rel (%p189) target = $region28
        $region27: #{tpu_custom_call.1} parent=23 // pred_region
          %s192 = sand.u32 %s17, 1
          %s193 = scalar_lea.sflag [#allocation4], %s192
          %s194 = sand.u32 %s39, 1
          %s195 = smul.addr %s194, 4
          %s196 = scalar_lea.vmem [#allocation3], %s195
          %198 = vsyncadd %s193, 0
          %s199 = smul.addr %s24, 4
          %s200 = scalar_lea.hbm %s0, %s199
          %s202 = sshll.u32 %s200, 4
          %s203 = int_to_ptr.hbm [resolvable:$true] %s202
          %s204 = sshll.u32 %s196, 4
          %s205 = int_to_ptr.vmem [resolvable:$true] %s204
          %207 = dma.hbm_to_vmem [thread:$0]  %s203, 64, %s205, %s193
        $region28: #{tpu_custom_call.1} parent=23 // pred_fallthru
          _
        // Predicated region
        $region29: #{tpu_custom_call.1} parent=23 // pred_check
          %p208 = pneg %p119
        $region30: #{tpu_custom_call.1} parent=23 // pred_check_branch
          %210 = sbr.rel (%p208) target = $region32
        $region31: #{tpu_custom_call.1} parent=23 // pred_region
          %s211 = sand.u32 %s17, 1
          %s212 = scalar_lea.sflag [#allocation4], %s211
          %s213 = sand.u32 %s109, 1
          %s214 = smul.addr %s213, 32
          %s215 = scalar_lea.vmem [#allocation8], %s214
          %217 = vsyncadd %s212, 0
          %s218 = smul.addr %s24, 4
          %s219 = sadd.s32 %s25, %s218
          %s220 = smul.addr %s219, 8
          %s221 = scalar_lea.hbm %s3, %s220
          %s222 = sshll.u32 %s221, 4
          %s223 = int_to_ptr.hbm [resolvable:$true] %s222
          %s224 = sshll.u32 %s215, 4
          %s225 = int_to_ptr.vmem [resolvable:$true] %s224
          %230 = dma.hbm_to_vmem [thread:$0]  %s223, 512, %s225, %s212, 128, 128, 8
        $region32: #{tpu_custom_call.1} parent=23 // pred_fallthru
          _
      $region24: #{tpu_custom_call.1} parent=5 // pred_fallthru
        _
      %p231 = scmp.le.s32.totalorder 1, %s17
      %p232 = scmp.lt.s32.totalorder %s17, 3
      %p233 = pnand %p231, %p232
      %p234 = pneg %p233
      // Predicated region
      $region33: #{tpu_custom_call.1} parent=5 // pred_check
        _
      $region34: #{tpu_custom_call.1} parent=5 // pred_check_branch
        %236 = sbr.rel (%p233) target = $region36
      $region35: #{tpu_custom_call.1} parent=5 // pred_region
        %s237 = ssub.s32 %s17, 1
        %s238 = sand.u32 %s22, 1
        %s239 = scalar_lea.sflag [#allocation4], %s238
        %s240 = sand.u32 %s42, 1
        %s241 = smul.addr %s240, 4
        %s242 = scalar_lea.vmem [#allocation3], %s241
        // Predicated region
        $region37: #{tpu_custom_call.1} parent=35 // pred_check
          %p243 = pneg %p55
        $region38: #{tpu_custom_call.1} parent=35 // pred_check_branch
          %245 = sbr.rel (%p243) target = $region40
        $region39: #{tpu_custom_call.1} parent=35 // pred_region
          %247 = dma.done %s239, 64
        $region40: #{tpu_custom_call.1} parent=35 // pred_fallthru
          _
        // Predicated region
        $region41: #{tpu_custom_call.1} parent=35 // pred_check
          %p248 = pneg %p76
        $region42: #{tpu_custom_call.1} parent=35 // pred_check_branch
          %250 = sbr.rel (%p248) target = $region44
        $region43: #{tpu_custom_call.1} parent=35 // pred_region
          %252 = dma.done [#allocation7], 256
        $region44: #{tpu_custom_call.1} parent=35 // pred_fallthru
          _
        %s253 = sand.u32 %s22, 1
        %s254 = scalar_lea.sflag [#allocation4], %s253
        %s255 = sand.u32 %s112, 1
        %s256 = smul.addr %s255, 32
        %s257 = scalar_lea.vmem [#allocation8], %s256
        // Predicated region
        $region45: #{tpu_custom_call.1} parent=35 // pred_check
          %p258 = pneg %p125
        $region46: #{tpu_custom_call.1} parent=35 // pred_check_branch
          %260 = sbr.rel (%p258) target = $region48
        $region47: #{tpu_custom_call.1} parent=35 // pred_region
          %262 = dma.done %s254, 512
        $region48: #{tpu_custom_call.1} parent=35 // pred_fallthru
          _
        %s263 = sand.u32 %s22, 1
        %s264 = scalar_lea.sflag [#allocation4], %s263
        %s265 = sand.u32 %s42, 1
        %s266 = smul.addr %s265, 4
        %s267 = scalar_lea.vmem [#allocation3], %s266
        %p268 = pneg %p55
        %p269 = pneg %p52
        %p270 = pneg %p76
        %p271 = pneg %p73
        %p272 = pneg %p97
        %p273 = pneg %p94
        %s274 = sand.u32 %s22, 1
        %s275 = scalar_lea.sflag [#allocation4], %s274
        %s276 = sand.u32 %s112, 1
        %s277 = smul.addr %s276, 32
        %s278 = scalar_lea.vmem [#allocation8], %s277
        %p279 = pneg %p125
        %p280 = pneg %p122
        %p281 = pneg %p153
        %p282 = pneg %p150
        %s283 = sand.u32 %s140, 1
        %s284 = scalar_lea.sflag [#allocation5], %s283
        %s285 = sand.u32 %s140, 1
        %s286 = smul.addr %s285, 4
        %s287 = scalar_lea.vmem [#allocation9], %s286
        %p289 = scmp.eq.s32.totalorder %s27, 0
        // Predicated region
        $region49: #{tpu_custom_call.1} parent=35 // pred_check
          %p290 = pneg %p289
        $region50: #{tpu_custom_call.1} parent=35 // pred_check_branch
          %292 = sbr.rel (%p290) target = $region52
        $region51: #{tpu_custom_call.1} parent=35 // pred_region
          %v293 = vld [vmem:[%s242] sm:$0xf]
          %v294 = vld [vmem:[#allocation6] sm:$0xf]
          %v295 = vld [vmem:[#allocation6 + $0x4] sm:$0xf]
          %v296 = vld [vmem:[#allocation6 + $0x8] sm:$0xf]
          %v297 = vld [vmem:[#allocation6 + $0xc] sm:$0xf]
          %v298 = vld [vmem:[%s2] sm:$0x1]
          %v300 = vperm.slane %v298, 0
          %v306 = vunpack.c.l.b16 %v294
          %v307 = vunpack.c.l.b16 %v295
          %v308 = vunpack.c.l.b16 %v296
          %v309 = vunpack.c.l.b16 %v297
          %v310 = vpack.c.b16 %v307, %v306
          %v311 = vpack.c.b16 %v309, %v308
          %vm314 = vcmask 261120
          %v316 = vsel %vm314, %v293, 0
          %318 = vmatpush.bf16.msra.mxu0 0
          %319 = vmatpush.bf16.msra.mxu0 0
          %320 = vmatpush.bf16.msra.mxu0 0
          %321 = vmatpush.bf16.msra.mxu0 0
          %322 = vmatpush.bf16.msra.mxu0 0
          %323 = vmatpush.bf16.msra.mxu0 0
          %324 = vmatpush.bf16.msra.mxu0 %v311
          %325 = vmatpush.bf16.msra.mxu0 %v310
          %326 = vmatmul.bf16.gmra.mxu0 %v316
          %v327 = vpop.f32.mrf.mxu0
          %v328 = vadd.f32 %v300, %v327
          %v329 = vpop.f32.mrf.mxu0
          %330 = vdwg.mxu0
          %v331 = vpack.c.bf16 %v328, %v328
          %vm332 = vcmask 60416
          %333 = vst.msk [vmem:[#allocation2] sm:$0xf] %vm332, %v331
          %335 = vrot.lane.b32.xlu0 %v331, 120
          %v336 = vpop.permute.xlu0 %335
          %s338 = scalar_lea.vmem [#allocation2], 4
          %339 = vst.msk [vmem:[%s338] sm:$0xf] %vm332, %v336
          %340 = vrot.lane.b32.xlu0 %v331, 112
          %v341 = vpop.permute.xlu0 %340
          %s343 = scalar_lea.vmem [#allocation2], 8
          %344 = vst.msk [vmem:[%s343] sm:$0xf] %vm332, %v341
          %345 = vrot.lane.b32.xlu0 %v331, 104
          %v346 = vpop.permute.xlu0 %345
          %s348 = scalar_lea.vmem [#allocation2], 12
          %349 = vst.msk [vmem:[%s348] sm:$0xf] %vm332, %v346
        $region52: #{tpu_custom_call.1} parent=35 // pred_fallthru
          _
        %v350 = vld [vmem:[%s257] sm:$0xff]
        %v351 = vpack.c.bf16 %v350, %v350
        %v352 = vld [vmem:[#allocation2] sm:$0xf]
        %vm353 = vcmask 64512
        %v355 = vsel %vm353, %v351, 0
        %vm357 = vcmask 1043456
        %v359 = vsel %vm357, %v352, 0
        %361 = vmatpush.bf16.msra.mxu0 0
        %362 = vmatpush.bf16.msra.mxu0 0
        %363 = vmatpush.bf16.msra.mxu0 0
        %364 = vmatpush.bf16.msra.mxu0 0
        %365 = vmatpush.bf16.msra.mxu0 0
        %366 = vmatpush.bf16.msra.mxu0 0
        %367 = vmatpush.bf16.msra.mxu0 0
        %368 = vmatpush.bf16.msra.mxu0 %v359
        %369 = vmatmul.bf16.gmra.mxu0 %v355
        %v370 = vpop.f32.mrf.mxu0
        %v371 = vadd.f32 0.0, %v370
        %v372 = vpop.f32.mrf.mxu0
        %373 = vdwg.mxu0
        %s374 = scalar_lea.vmem %s257, 8 [#allocation8]
        %v375 = vld [vmem:[%s374] sm:$0xff]
        %v376 = vpack.c.bf16 %v375, %v375
        %s377 = scalar_lea.vmem [#allocation2], 4
        %v378 = vld [vmem:[%s377] sm:$0xf]
        %v380 = vsel %vm353, %v376, 0
        %v383 = vsel %vm357, %v378, 0
        %385 = vmatpush.bf16.msra.mxu0 0
        %386 = vmatpush.bf16.msra.mxu0 0
        %387 = vmatpush.bf16.msra.mxu0 0
        %388 = vmatpush.bf16.msra.mxu0 0
        %389 = vmatpush.bf16.msra.mxu0 0
        %390 = vmatpush.bf16.msra.mxu0 0
        %391 = vmatpush.bf16.msra.mxu0 0
        %392 = vmatpush.bf16.msra.mxu0 %v383
        %393 = vmatmul.bf16.gmra.mxu0 %v380
        %v394 = vpop.f32.mrf.mxu0
        %v395 = vadd.f32 0.0, %v394
        %v396 = vpop.f32.mrf.mxu0
        %397 = vdwg.mxu0
        %s398 = scalar_lea.vmem %s257, 16 [#allocation8]
        %v399 = vld [vmem:[%s398] sm:$0xff]
        %v400 = vpack.c.bf16 %v399, %v399
        %s401 = scalar_lea.vmem [#allocation2], 8
        %v402 = vld [vmem:[%s401] sm:$0xf]
        %v404 = vsel %vm353, %v400, 0
        %v407 = vsel %vm357, %v402, 0
        %409 = vmatpush.bf16.msra.mxu0 0
        %410 = vmatpush.bf16.msra.mxu0 0
        %411 = vmatpush.bf16.msra.mxu0 0
        %412 = vmatpush.bf16.msra.mxu0 0
        %413 = vmatpush.bf16.msra.mxu0 0
        %414 = vmatpush.bf16.msra.mxu0 0
        %415 = vmatpush.bf16.msra.mxu0 0
        %416 = vmatpush.bf16.msra.mxu0 %v407
        %417 = vmatmul.bf16.gmra.mxu0 %v404
        %v418 = vpop.f32.mrf.mxu0
        %v419 = vadd.f32 0.0, %v418
        %v420 = vpop.f32.mrf.mxu0
        %421 = vdwg.mxu0
        %s422 = scalar_lea.vmem %s257, 24 [#allocation8]
        %v423 = vld [vmem:[%s422] sm:$0xff]
        %v424 = vpack.c.bf16 %v423, %v423
        %s425 = scalar_lea.vmem [#allocation2], 12
        %v426 = vld [vmem:[%s425] sm:$0xf]
        %v428 = vsel %vm353, %v424, 0
        %v431 = vsel %vm357, %v426, 0
        %433 = vmatpush.bf16.msra.mxu0 0
        %434 = vmatpush.bf16.msra.mxu0 0
        %435 = vmatpush.bf16.msra.mxu0 0
        %436 = vmatpush.bf16.msra.mxu0 0
        %437 = vmatpush.bf16.msra.mxu0 0
        %438 = vmatpush.bf16.msra.mxu0 0
        %439 = vmatpush.bf16.msra.mxu0 0
        %440 = vmatpush.bf16.msra.mxu0 %v431
        %441 = vmatmul.bf16.gmra.mxu0 %v428
        %v442 = vpop.f32.mrf.mxu0
        %v443 = vadd.f32 0.0, %v442
        %v444 = vpop.f32.mrf.mxu0
        %445 = vdwg.mxu0
        %447 = vrot.lane.b32.xlu0 %v395, 8
        %v448 = vpop.permute.xlu0 %447
        %451 = vrot.lane.b32.xlu0 %v419, 16
        %v452 = vpop.permute.xlu0 %451
        %455 = vrot.lane.b32.xlu0 %v443, 24
        %v456 = vpop.permute.xlu0 %455
        %v458 = vsel %vm353, %v371, %v448
        %vm459 = vcmask 130048
        %v460 = vsel %vm459, %v458, %v452
        %vm461 = vcmask 195584
        %v462 = vsel %vm461, %v460, %v456
        %v463 = vpack.c.bf16 %v462, %v462
        %vm464 = vcmask 257024
        %465 = vst.msk [vmem:[%s287] sm:$0xf] %vm464, %v463
        %s466 = sand.u32 %s140, 1
        %s467 = scalar_lea.sflag [#allocation5], %s466
        %s468 = sand.u32 %s140, 1
        %s469 = smul.addr %s468, 4
        %s470 = scalar_lea.vmem [#allocation9], %s469
        // Predicated region
        $region53: #{tpu_custom_call.1} parent=35 // pred_check
          %p471 = pneg %p150
        $region54: #{tpu_custom_call.1} parent=35 // pred_check_branch
          %473 = sbr.rel (%p471) target = $region56
        $region55: #{tpu_custom_call.1} parent=35 // pred_region
          %475 = vsyncadd %s467, 0
          %s476 = sadd.s32 %s27, %s26
          %s477 = smul.addr %s476, 4
          %s478 = scalar_lea.hbm %s4, %s477
          %s480 = sshll.u32 %s470, 4
          %s481 = int_to_ptr.vmem [resolvable:$true] %s480
          %s482 = sshll.u32 %s478, 4
          %s483 = int_to_ptr.hbm [resolvable:$true] %s482
          %485 = dma.vmem_to_hbm [thread:$0]  %s481, 64, %s483, %s467
        $region56: #{tpu_custom_call.1} parent=35 // pred_fallthru
          _
      $region36: #{tpu_custom_call.1} parent=5 // pred_fallthru
        _
      %p486 = scmp.le.s32.totalorder 2, %s17
      // Predicated region
      $region57: #{tpu_custom_call.1} parent=5 // pred_check
        %p487 = pneg %p486
      $region58: #{tpu_custom_call.1} parent=5 // pred_check_branch
        %489 = sbr.rel (%p487) target = $region60
      $region59: #{tpu_custom_call.1} parent=5 // pred_region
        %s490 = ssub.s32 %s17, 2
        // Predicated region
        $region61: #{tpu_custom_call.1} parent=59 // pred_check
          %p491 = pneg %p156
        $region62: #{tpu_custom_call.1} parent=59 // pred_check_branch
          %493 = sbr.rel (%p491) target = $region64
        $region63: #{tpu_custom_call.1} parent=59 // pred_region
          %s494 = sand.u32 %s141, 1
          %s495 = scalar_lea.sflag [#allocation5], %s494
          %s496 = sand.u32 %s141, 1
          %s497 = smul.addr %s496, 4
          %s498 = scalar_lea.vmem [#allocation9], %s497
          %500 = dma.done %s495, 64
        $region64: #{tpu_custom_call.1} parent=59 // pred_fallthru
          _
      $region60: #{tpu_custom_call.1} parent=5 // pred_fallthru
        _
    $region6: #{tpu_custom_call.1} parent=1 // loop_footer
      %s21 = sadd.s32 1, %s17
    $region7: #{tpu_custom_call.1} parent=1 // loop_footer_branch
      %16 = sbr.rel target = $region3
    $region8: #{tpu_custom_call.1} parent=1 // loop_exit
      _
    %501 = vsyncpa [#allocation4], 1
    %s502 = scalar_lea.sflag [#allocation4], 1
    %503 = vsyncpa %s502, 1
    %504 = vsyncpa [#allocation7], 1
    %505 = vsyncpa [#allocation5], 1
    %s506 = scalar_lea.sflag [#allocation5], 1
    %507 = vsyncpa %s506, 1

</llo_original>
